<compile_context>
chip_gen: v7x
topology: tpu7x:2x2x1
jax: 0.10.0
libtpu: 0.0.40
codegen_flags: <defaults>
</compile_context>

<pallas_src>
import functools
import math

import jax
import jax.numpy as jnp
from jax.experimental import pallas as pl
from jax.experimental.pallas import tpu as pltpu


# ---------------------------------------------------------------------------
# Kernels
# ---------------------------------------------------------------------------

def _sum_last2(t):
    # Reduce the last two dims (sublane, lane), keeping dims.  Two single-axis
    # reductions keep the Mosaic lowering simple.
    return jnp.sum(jnp.sum(t, axis=-1, keepdims=True), axis=-2, keepdims=True)


def _leaky_relu(y, negative_slope):
    if negative_slope is None:
        return y
    return jnp.where(y >= 0, y, y * negative_slope)


def _gn_fused_kernel(x_ref, gamma_ref, beta_ref, o_ref, *, eps, inv_count,
                     negative_slope):
    """One-pass GroupNorm (+ LeakyReLU) when the whole group fits in one block.

    x_ref:              (1, 1, Cg, S)
    gamma_ref/beta_ref: (1, Cg, 1)   (fetched once per (n, g) grid step)
    """
    x = x_ref[...].astype(jnp.float32)
    mean = _sum_last2(x) * inv_count                      # (1, 1, 1, 1)
    xc = x - mean
    var = _sum_last2(xc * xc) * inv_count                 # centered form (safer)
    inv_std = jax.lax.rsqrt(var + eps)

    gamma = gamma_ref[...].astype(jnp.float32)[None]      # (1, 1, Cg, 1)
    beta = beta_ref[...].astype(jnp.float32)[None]
    scale = gamma * inv_std                               # fold affine
    shift = beta - mean * scale

    y = x * scale + shift                                 # 2 elementwise passes
    o_ref[...] = _leaky_relu(y, negative_slope).astype(o_ref.dtype)


def _gn_stats_kernel(x_ref, gamma_ref, beta_ref, scale_ref, shift_ref,
                     sum_acc, sq_acc, *, eps, inv_count):
    """Streaming pass 1: accumulate sum / sum-of-squares over spatial chunks;
    finalize per-channel scale/shift at the last chunk.

    x_ref:               (1, 1, Cg, Sc)  one spatial chunk of one (batch, group)
    scale_ref/shift_ref: (1, 1, Cg, 1)   written at the last chunk only
    sum_acc/sq_acc:      (1, 1, Cg, 1)   VMEM scratch accumulators (f32)
    """
    s = pl.program_id(2)

    @pl.when(s == 0)
    def _init():
        sum_acc[...] = jnp.zeros_like(sum_acc)
        sq_acc[...] = jnp.zeros_like(sq_acc)

    x = x_ref[...].astype(jnp.float32)
    sum_acc[...] += jnp.sum(x, axis=-1, keepdims=True)    # one traversal
    sq_acc[...] += jnp.sum(x * x, axis=-1, keepdims=True)

    @pl.when(s == pl.num_programs(2) - 1)
    def _finalize():
        mean = jnp.sum(sum_acc[...], axis=-2, keepdims=True) * inv_count
        ex2 = jnp.sum(sq_acc[...], axis=-2, keepdims=True) * inv_count
        var = ex2 - mean * mean                           # f32 accumulation
        inv_std = jax.lax.rsqrt(var + eps)
        gamma = gamma_ref[...].astype(jnp.float32)[None]  # (1, 1, Cg, 1)
        beta = beta_ref[...].astype(jnp.float32)[None]
        scale = gamma * inv_std
        scale_ref[...] = scale
        shift_ref[...] = beta - mean * scale


def _gn_apply_kernel(x_ref, scale_ref, shift_ref, o_ref, *, negative_slope):
    """Streaming pass 2: out = act(x * scale + shift), elementwise over chunks."""
    x = x_ref[...].astype(jnp.float32)
    y = x * scale_ref[...] + shift_ref[...]               # scale/shift chunk-invariant
    o_ref[...] = _leaky_relu(y, negative_slope).astype(o_ref.dtype)


# ---------------------------------------------------------------------------
# Wrapper
# ---------------------------------------------------------------------------

def _pick_spatial_chunk(S, Cg, itemsize, max_block_bytes):
    """Choose a lane-dense spatial chunk so one (Cg, Sc) block stays within
    `max_block_bytes` (so in+out blocks x 2 pipeline buffers fit VMEM on every
    TPU generation, including v7x's 64 MiB)."""
    bytes_per_lane = max(1, Cg * itemsize)
    max_lanes = max(128, (max_block_bytes // bytes_per_lane) // 128 * 128)
    if S <= max_lanes:
        return S, 1, S                       # single chunk: fused one-pass path
    sc = max_lanes
    while sc >= 128:                         # largest 128-multiple dividing S
        if S % sc == 0:
            return sc, S // sc, S
        sc -= 128
    sc = max_lanes                           # no clean divisor: zero-pad spatial
    nc = -(-S // sc)
    return sc, nc, nc * sc


def group_norm_act(x, gamma, beta, *, num_groups=8, eps=1e-6,
                   negative_slope=0.2, max_block_bytes=4 * 1024 * 1024,
                   vmem_limit_bytes=48 * 1024 * 1024):
    """GroupNorm(num_groups, C, eps=1e-6, affine=True) fused with LeakyReLU.

    x: (N, C, *spatial) — e.g. NCDHW for the 3-D Encoder.  Output has the same
    shape and dtype (bf16 I/O supported; stats always f32).  Set
    negative_slope=None to disable the fused activation.
    """
    N, C = x.shape[0], x.shape[1]
    spatial = x.shape[2:]
    S = int(math.prod(spatial))
    G = num_groups
    assert C % G == 0, "channels must be divisible by num_groups"
    Cg = C // G

    x_r = x.reshape(N, G, Cg, S)
    gamma_r = gamma.astype(jnp.float32).reshape(G, Cg, 1)
    beta_r = beta.astype(jnp.float32).reshape(G, Cg, 1)
    inv_count = 1.0 / float(Cg * S)          # true element count (pad-safe)

    Sc, n_chunks, S_pad = _pick_spatial_chunk(S, Cg, x.dtype.itemsize,
                                              max_block_bytes)

    if n_chunks == 1:
        # Whole group fits in one block: single fused one-pass kernel.
        y = pl.pallas_call(
            functools.partial(_gn_fused_kernel, eps=eps, inv_count=inv_count,
                              negative_slope=negative_slope),
            grid=(N, G),
            in_specs=[
                pl.BlockSpec((1, 1, Cg, S), lambda n, g: (n, g, 0, 0)),
                pl.BlockSpec((1, Cg, 1), lambda n, g: (g, 0, 0)),
                pl.BlockSpec((1, Cg, 1), lambda n, g: (g, 0, 0)),
            ],
            out_specs=pl.BlockSpec((1, 1, Cg, S), lambda n, g: (n, g, 0, 0)),
            out_shape=jax.ShapeDtypeStruct((N, G, Cg, S), x.dtype),
            compiler_params=pltpu.CompilerParams(
                dimension_semantics=("parallel", "parallel"),
                vmem_limit_bytes=vmem_limit_bytes),
        )(x_r, gamma_r, beta_r)
        return y.reshape(x.shape)

    # ---- streaming (two-pass) path ----
    # Zero-padding the spatial axis does not change sum / sum-of-squares, and
    # inv_count uses the true element count, so stats stay exact.
    if S_pad != S:
        x_r = jnp.pad(x_r, ((0, 0), (0, 0), (0, 0), (0, S_pad - S)))

    # Pass 1: per-(n, g) statistics -> per-channel scale / shift.
    scale, shift = pl.pallas_call(
        functools.partial(_gn_stats_kernel, eps=eps, inv_count=inv_count),
        grid=(N, G, n_chunks),
        in_specs=[
            pl.BlockSpec((1, 1, Cg, Sc), lambda n, g, s: (n, g, 0, s)),
            pl.BlockSpec((1, Cg, 1), lambda n, g, s: (g, 0, 0)),   # chunk-invariant
            pl.BlockSpec((1, Cg, 1), lambda n, g, s: (g, 0, 0)),
        ],
        out_specs=[
            pl.BlockSpec((1, 1, Cg, 1), lambda n, g, s: (n, g, 0, 0)),
            pl.BlockSpec((1, 1, Cg, 1), lambda n, g, s: (n, g, 0, 0)),
        ],
        out_shape=[
            jax.ShapeDtypeStruct((N, G, Cg, 1), jnp.float32),
            jax.ShapeDtypeStruct((N, G, Cg, 1), jnp.float32),
        ],
        scratch_shapes=[
            pltpu.VMEM((1, 1, Cg, 1), jnp.float32),
            pltpu.VMEM((1, 1, Cg, 1), jnp.float32),
        ],
        compiler_params=pltpu.CompilerParams(
            dimension_semantics=("parallel", "parallel", "arbitrary"),
            vmem_limit_bytes=vmem_limit_bytes),
    )(x_r, gamma_r, beta_r)

    # Pass 2: normalize + folded affine (+ fused LeakyReLU).
    y = pl.pallas_call(
        functools.partial(_gn_apply_kernel, negative_slope=negative_slope),
        grid=(N, G, n_chunks),
        in_specs=[
            pl.BlockSpec((1, 1, Cg, Sc), lambda n, g, s: (n, g, 0, s)),
            pl.BlockSpec((1, 1, Cg, 1), lambda n, g, s: (n, g, 0, 0)),
            pl.BlockSpec((1, 1, Cg, 1), lambda n, g, s: (n, g, 0, 0)),
        ],
        out_specs=pl.BlockSpec((1, 1, Cg, Sc), lambda n, g, s: (n, g, 0, s)),
        out_shape=jax.ShapeDtypeStruct((N, G, Cg, S_pad), x.dtype),
        compiler_params=pltpu.CompilerParams(
            dimension_semantics=("parallel", "parallel", "parallel"),
            vmem_limit_bytes=vmem_limit_bytes),
    )(x_r, scale, shift)

    if S_pad != S:
        y = y[..., :S]
    return y.reshape(x.shape)


def group_norm_act_ref(x, gamma, beta, *, num_groups=8, eps=1e-6,
                       negative_slope=0.2):
    """Pure-JAX reference (torch.nn.GroupNorm + LeakyReLU semantics)."""
    N, C = x.shape[0], x.shape[1]
    spatial = x.shape[2:]
    G = num_groups
    xr = x.reshape(N, G, -1).astype(jnp.float32)
    mean = jnp.mean(xr, axis=-1, keepdims=True)
    var = jnp.mean((xr - mean) ** 2, axis=-1, keepdims=True)
    xn = ((xr - mean) * jax.lax.rsqrt(var + eps)).reshape((N, C) + spatial)
    bshape = (1, C) + (1,) * len(spatial)
    y = xn * gamma.reshape(bshape).astype(jnp.float32) \
        + beta.reshape(bshape).astype(jnp.float32)
    if negative_slope is not None:
        y = jnp.where(y >= 0, y, y * negative_slope)
    return y.astype(x.dtype)


# ---------------------------------------------------------------------------
# Encoder forward (Conv3d via XLA, GroupNorm+LeakyReLU via the Pallas kernels)
# ---------------------------------------------------------------------------

def conv3d(x, w, b, *, stride, padding):
    out = jax.lax.conv_general_dilated(
        x, w,
        window_strides=(stride,) * 3,
        padding=[(padding, padding)] * 3,
        dimension_numbers=("NCDHW", "OIDHW", "NCDHW"),
        precision=jax.lax.Precision.HIGHEST)
    return out + b[None, :, None, None, None]


def _conv_block_apply(p, x, *, stride, gn):
    h = conv3d(x, p["w"], p["b"], stride=stride, padding=1)
    return gn(h, p["gamma"], p["beta"], num_groups=8, eps=1e-6,
              negative_slope=0.2)


def _res_block_apply(p, x, *, gn):
    # Note: the PyTorch ResNet_block reuses the SAME GroupNorm module twice,
    # so gamma/beta are shared between both normalizations.
    h = conv3d(x, p["w1"], p["b1"], stride=1, padding=1)
    h = gn(h, p["gamma"], p["beta"], num_groups=8, eps=1e-6, negative_slope=0.2)
    h = conv3d(h, p["w2"], p["b2"], stride=1, padding=1)
    h = gn(h, p["gamma"], p["beta"], num_groups=8, eps=1e-6, negative_slope=0.2)
    return h + x


def encoder_forward(params, x, *, gn=group_norm_act):
    h = _conv_block_apply(params["conv1"], x, stride=2, gn=gn)
    h = _res_block_apply(params["res1"], h, gn=gn)
    h = _conv_block_apply(params["conv2"], h, stride=2, gn=gn)
    h = _res_block_apply(params["res2"], h, gn=gn)
    h = _conv_block_apply(params["conv3"], h, stride=2, gn=gn)
    h = _res_block_apply(params["res3"], h, gn=gn)
    h = _conv_block_apply(params["conv4"], h, stride=2, gn=gn)
    h = _res_block_apply(params["res4"], h, gn=gn)
    h = _conv_block_apply(params["conv5"], h, stride=1, gn=gn)
    h = _res_block_apply(params["res5"], h, gn=gn)
    return h


def init_encoder_params(key):
    keys = iter(jax.random.split(key, 64))

    def conv_init(cin, cout, k):
        fan_in = cin * k * k * k
        w = jax.random.normal(next(keys), (cout, cin, k, k, k),
                              jnp.float32) * (fan_in ** -0.5)
        return w, jnp.zeros((cout,), jnp.float32)

    def gn_init(ch):
        gamma = 1.0 + 0.1 * jax.random.normal(next(keys), (ch,), jnp.float32)
        beta = 0.05 * jax.random.normal(next(keys), (ch,), jnp.float32)
        return gamma, beta

    def conv_block_params(cin, cout, k):
        w, b = conv_init(cin, cout, k)
        gamma, beta = gn_init(cout)
        return {"w": w, "b": b, "gamma": gamma, "beta": beta}

    def res_block_params(ch):
        w1, b1 = conv_init(ch, ch, 3)
        w2, b2 = conv_init(ch, ch, 3)
        gamma, beta = gn_init(ch)        # shared GroupNorm, as in the PyTorch module
        return {"w1": w1, "b1": b1, "w2": w2, "b2": b2,
                "gamma": gamma, "beta": beta}

    return {
        "conv1": conv_block_params(1, 32, 4),   "res1": res_block_params(32),
        "conv2": conv_block_params(32, 64, 4),  "res2": res_block_params(64),
        "conv3": conv_block_params(64, 128, 4), "res3": res_block_params(128),
        "conv4": conv_block_params(128, 256, 4), "res4": res_block_params(256),
        "conv5": conv_block_params(256, 512, 3), "res5": res_block_params(512),
    }


# ---------------------------------------------------------------------------
# Tests
# ---------------------------------------------------------------------------

if __name__ == "__main__":
    k = jax.random.split(jax.random.PRNGKey(0), 10)

    # 1) Streaming (multi-chunk) path: small max_block_bytes forces 4 spatial
    #    chunks of 1024 lanes (exercises the accumulator / finalize logic).
    x1 = jax.random.normal(k[0], (2, 32, 16, 16, 16), jnp.float32)
    g1 = 1.0 + 0.1 * jax.random.normal(k[1], (32,), jnp.float32)
    b1 = 0.1 * jax.random.normal(k[2], (32,), jnp.float32)
    out1 = jax.block_until_ready(
        group_norm_act(x1, g1, b1, max_block_bytes=16 * 1024))
    ref1 = group_norm_act_ref(x1, g1, b1)
    assert jnp.allclose(out1, ref1, atol=1e-4, rtol=1e-4), "multi-chunk mismatch"

    # 2) Ragged spatial size (zero-padding path): S = 5*7*9 = 315 -> 2 chunks of 256.
    x2 = jax.random.normal(k[3], (1, 16, 5, 7, 9), jnp.float32)
    g2 = 1.0 + 0.1 * jax.random.normal(k[4], (16,), jnp.float32)
    b2 = 0.1 * jax.random.normal(k[5], (16,), jnp.float32)
    out2 = jax.block_until_ready(
        group_norm_act(x2, g2, b2, max_block_bytes=2 * 1024))
    ref2 = group_norm_act_ref(x2, g2, b2)
    assert jnp.allclose(out2, ref2, atol=1e-4, rtol=1e-4), "padded-path mismatch"

    # 3) bf16 I/O (single-chunk fused path): halves HBM bytes, stats stay f32.
    x3 = jax.random.normal(k[6], (1, 16, 8, 8, 8), jnp.float32).astype(jnp.bfloat16)
    g3 = jnp.ones((16,), jnp.float32)
    b3 = jnp.zeros((16,), jnp.float32)
    out3 = jax.block_until_ready(group_norm_act(x3, g3, b3))
    assert out3.dtype == jnp.bfloat16
    ref3 = group_norm_act_ref(x3, g3, b3)
    assert jnp.allclose(out3.astype(jnp.float32), ref3.astype(jnp.float32),
                        atol=5e-2, rtol=5e-2), "bf16 mismatch"

    # 4) Full Encoder forward: Conv3d via XLA, GroupNorm+LeakyReLU via Pallas.
    params = init_encoder_params(k[7])
    x_in = jax.random.normal(k[8], (1, 1, 16, 16, 16), jnp.float32)
    y = jax.block_until_ready(encoder_forward(params, x_in, gn=group_norm_act))
    y_ref = encoder_forward(params, x_in, gn=group_norm_act_ref)
    assert y.shape == (1, 512, 1, 1, 1), y.shape
    assert bool(jnp.all(jnp.isfinite(y))), "non-finite encoder output"
    assert jnp.allclose(y, y_ref, atol=1e-2, rtol=1e-2), "encoder mismatch"

    print("KERNEL_OK")
</pallas_src>

<mosaic_0001>
module attributes {stable_mosaic.version = 11 : i64} {
  func.func @_gn_stats_kernel(%arg0: i32, %arg1: i32, %arg2: i32, %arg3: memref<1x1x4x1024xf32, #tpu.memory_space<vmem>>, %arg4: memref<1x4x1xf32, #tpu.memory_space<vmem>>, %arg5: memref<1x4x1xf32, #tpu.memory_space<vmem>>, %arg6: memref<1x1x4x1xf32, #tpu.memory_space<vmem>>, %arg7: memref<1x1x4x1xf32, #tpu.memory_space<vmem>>, %arg8: memref<1x1x4x1xf32, #tpu.memory_space<vmem>>, %arg9: memref<1x1x4x1xf32, #tpu.memory_space<vmem>>) attributes {dimension_semantics = [#tpu.dimension_semantics<parallel>, #tpu.dimension_semantics<parallel>, #tpu.dimension_semantics<arbitrary>], iteration_bounds = array<i64: 2, 8, 4>, scalar_prefetch = 0 : i64, scratch_operands = 2 : i64, tpu.core_type = #tpu.core_type<tc>, window_params = [{transform_indices = @transform_0, window_bounds = array<i64: 1, 1, 4, 1024>}, {transform_indices = @transform_1, window_bounds = array<i64: 1, 4, 1>}, {transform_indices = @transform_2, window_bounds = array<i64: 1, 4, 1>}, {transform_indices = @transform_3, window_bounds = array<i64: 1, 1, 4, 1>}, {transform_indices = @transform_4, window_bounds = array<i64: 1, 1, 4, 1>}]} {
    %c0_i32 = arith.constant 0 : i32
    %0 = arith.cmpi eq, %arg2, %c0_i32 : i32
    %1 = arith.extui %0 : i1 to i32
    %c0_i32_0 = arith.constant 0 : i32
    %2 = arith.cmpi ne, %1, %c0_i32_0 : i32
    scf.if %2 {
      %cst_22 = arith.constant 0.000000e+00 : f32
      %18 = vector.broadcast %cst_22 : f32 to vector<1x1x4x1xf32>
      %c0_23 = arith.constant 0 : index
      %c0_24 = arith.constant 0 : index
      %c0_25 = arith.constant 0 : index
      %c0_26 = arith.constant 0 : index
      %19 = vector.load %arg8[%c0_23, %c0_24, %c0_25, %c0_26] : memref<1x1x4x1xf32, #tpu.memory_space<vmem>>, vector<1x1x4x1xf32>
      tpu.vector_store %arg8[%c0_23, %c0_24, %c0_25, %c0_26], %18 {strides = array<i32>} : memref<1x1x4x1xf32, #tpu.memory_space<vmem>>, vector<1x1x4x1xf32>,
      %cst_27 = arith.constant 0.000000e+00 : f32
      %20 = vector.broadcast %cst_27 : f32 to vector<1x1x4x1xf32>
      %c0_28 = arith.constant 0 : index
      %c0_29 = arith.constant 0 : index
      %c0_30 = arith.constant 0 : index
      %c0_31 = arith.constant 0 : index
      %21 = vector.load %arg9[%c0_28, %c0_29, %c0_30, %c0_31] : memref<1x1x4x1xf32, #tpu.memory_space<vmem>>, vector<1x1x4x1xf32>
      tpu.vector_store %arg9[%c0_28, %c0_29, %c0_30, %c0_31], %20 {strides = array<i32>} : memref<1x1x4x1xf32, #tpu.memory_space<vmem>>, vector<1x1x4x1xf32>,
    } else {
    }
    %c0 = arith.constant 0 : index
    %c0_1 = arith.constant 0 : index
    %c0_2 = arith.constant 0 : index
    %c0_3 = arith.constant 0 : index
    %3 = vector.load %arg3[%c0, %c0_1, %c0_2, %c0_3] : memref<1x1x4x1024xf32, #tpu.memory_space<vmem>>, vector<1x1x4x1024xf32>
    %c0_4 = arith.constant 0 : index
    %c0_5 = arith.constant 0 : index
    %c0_6 = arith.constant 0 : index
    %c0_7 = arith.constant 0 : index
    %4 = vector.load %arg8[%c0_4, %c0_5, %c0_6, %c0_7] : memref<1x1x4x1xf32, #tpu.memory_space<vmem>>, vector<1x1x4x1xf32>
    %cst = arith.constant dense<0.000000e+00> : vector<1x1x4xf32>
    %5 = vector.multi_reduction <add>, %3, %cst [3] : vector<1x1x4x1024xf32> to vector<1x1x4xf32>
    %6 = vector.shape_cast %5 : vector<1x1x4xf32> to vector<1x1x4x1xf32>
    %7 = arith.addf %4, %6 : vector<1x1x4x1xf32>
    %c0_8 = arith.constant 0 : index
    %c0_9 = arith.constant 0 : index
    %c0_10 = arith.constant 0 : index
    %c0_11 = arith.constant 0 : index
    %8 = vector.load %arg8[%c0_8, %c0_9, %c0_10, %c0_11] : memref<1x1x4x1xf32, #tpu.memory_space<vmem>>, vector<1x1x4x1xf32>
    tpu.vector_store %arg8[%c0_8, %c0_9, %c0_10, %c0_11], %7 {strides = array<i32>} : memref<1x1x4x1xf32, #tpu.memory_space<vmem>>, vector<1x1x4x1xf32>,
    %c0_12 = arith.constant 0 : index
    %c0_13 = arith.constant 0 : index
    %c0_14 = arith.constant 0 : index
    %c0_15 = arith.constant 0 : index
    %9 = vector.load %arg9[%c0_12, %c0_13, %c0_14, %c0_15] : memref<1x1x4x1xf32, #tpu.memory_space<vmem>>, vector<1x1x4x1xf32>
    %10 = arith.mulf %3, %3 : vector<1x1x4x1024xf32>
    %cst_16 = arith.constant dense<0.000000e+00> : vector<1x1x4xf32>
    %11 = vector.multi_reduction <add>, %10, %cst_16 [3] : vector<1x1x4x1024xf32> to vector<1x1x4xf32>
    %12 = vector.shape_cast %11 : vector<1x1x4xf32> to vector<1x1x4x1xf32>
    %13 = arith.addf %9, %12 : vector<1x1x4x1xf32>
    %c0_17 = arith.constant 0 : index
    %c0_18 = arith.constant 0 : index
    %c0_19 = arith.constant 0 : index
    %c0_20 = arith.constant 0 : index
    %14 = vector.load %arg9[%c0_17, %c0_18, %c0_19, %c0_20] : memref<1x1x4x1xf32, #tpu.memory_space<vmem>>, vector<1x1x4x1xf32>
    tpu.vector_store %arg9[%c0_17, %c0_18, %c0_19, %c0_20], %13 {strides = array<i32>} : memref<1x1x4x1xf32, #tpu.memory_space<vmem>>, vector<1x1x4x1xf32>,
    %c3_i32 = arith.constant 3 : i32
    %15 = arith.cmpi eq, %arg2, %c3_i32 : i32
    %16 = arith.extui %15 : i1 to i32
    %c0_i32_21 = arith.constant 0 : i32
    %17 = arith.cmpi ne, %16, %c0_i32_21 : i32
    scf.if %17 {
      %c0_22 = arith.constant 0 : index
      %c0_23 = arith.constant 0 : index
      %c0_24 = arith.constant 0 : index
      %c0_25 = arith.constant 0 : index
      %18 = vector.load %arg8[%c0_22, %c0_23, %c0_24, %c0_25] : memref<1x1x4x1xf32, #tpu.memory_space<vmem>>, vector<1x1x4x1xf32>
      %cst_26 = arith.constant dense<0.000000e+00> : vector<1x1x1xf32>
      %19 = vector.multi_reduction <add>, %18, %cst_26 [2] : vector<1x1x4x1xf32> to vector<1x1x1xf32>
      %20 = vector.shape_cast %19 : vector<1x1x1xf32> to vector<1x1x1x1xf32>
      %cst_27 = arith.constant 6.10351563E-5 : f32
      %21 = vector.broadcast %cst_27 : f32 to vector<1x1x1x1xf32>
      %22 = arith.mulf %20, %21 : vector<1x1x1x1xf32>
      %c0_28 = arith.constant 0 : index
      %c0_29 = arith.constant 0 : index
      %c0_30 = arith.constant 0 : index
      %c0_31 = arith.constant 0 : index
      %23 = vector.load %arg9[%c0_28, %c0_29, %c0_30, %c0_31] : memref<1x1x4x1xf32, #tpu.memory_space<vmem>>, vector<1x1x4x1xf32>
      %cst_32 = arith.constant dense<0.000000e+00> : vector<1x1x1xf32>
      %24 = vector.multi_reduction <add>, %23, %cst_32 [2] : vector<1x1x4x1xf32> to vector<1x1x1xf32>
      %25 = vector.shape_cast %24 : vector<1x1x1xf32> to vector<1x1x1x1xf32>
      %cst_33 = arith.constant 6.10351563E-5 : f32
      %26 = vector.broadcast %cst_33 : f32 to vector<1x1x1x1xf32>
      %27 = arith.mulf %25, %26 : vector<1x1x1x1xf32>
      %28 = arith.mulf %22, %22 : vector<1x1x1x1xf32>
      %29 = arith.subf %27, %28 : vector<1x1x1x1xf32>
      %cst_34 = arith.constant 9.99999997E-7 : f32
      %30 = vector.broadcast %cst_34 : f32 to vector<1x1x1x1xf32>
      %31 = arith.addf %29, %30 : vector<1x1x1x1xf32>
      %32 = math.rsqrt %31 : vector<1x1x1x1xf32>
      %c0_35 = arith.constant 0 : index
      %c0_36 = arith.constant 0 : index
      %c0_37 = arith.constant 0 : index
      %33 = vector.load %arg4[%c0_35, %c0_36, %c0_37] : memref<1x4x1xf32, #tpu.memory_space<vmem>>, vector<1x4x1xf32>
      %34 = vector.shape_cast %33 : vector<1x4x1xf32> to vector<1x1x4x1xf32>
      %c0_38 = arith.constant 0 : index
      %c0_39 = arith.constant 0 : index
      %c0_40 = arith.constant 0 : index
      %35 = vector.load %arg5[%c0_38, %c0_39, %c0_40] : memref<1x4x1xf32, #tpu.memory_space<vmem>>, vector<1x4x1xf32>
      %36 = vector.shape_cast %35 : vector<1x4x1xf32> to vector<1x1x4x1xf32>
      %37 = vector.broadcast %32 : vector<1x1x1x1xf32> to vector<1x1x4x1xf32>
      %38 = arith.mulf %34, %37 : vector<1x1x4x1xf32>
      %c0_41 = arith.constant 0 : index
      %c0_42 = arith.constant 0 : index
      %c0_43 = arith.constant 0 : index
      %c0_44 = arith.constant 0 : index
      %39 = vector.load %arg6[%c0_41, %c0_42, %c0_43, %c0_44] : memref<1x1x4x1xf32, #tpu.memory_space<vmem>>, vector<1x1x4x1xf32>
      tpu.vector_store %arg6[%c0_41, %c0_42, %c0_43, %c0_44], %38 {strides = array<i32>} : memref<1x1x4x1xf32, #tpu.memory_space<vmem>>, vector<1x1x4x1xf32>,
      %40 = vector.broadcast %22 : vector<1x1x1x1xf32> to vector<1x1x4x1xf32>
      %41 = arith.mulf %40, %38 : vector<1x1x4x1xf32>
      %42 = arith.subf %36, %41 : vector<1x1x4x1xf32>
      %c0_45 = arith.constant 0 : index
      %c0_46 = arith.constant 0 : index
      %c0_47 = arith.constant 0 : index
      %c0_48 = arith.constant 0 : index
      %43 = vector.load %arg7[%c0_45, %c0_46, %c0_47, %c0_48] : memref<1x1x4x1xf32, #tpu.memory_space<vmem>>, vector<1x1x4x1xf32>
      tpu.vector_store %arg7[%c0_45, %c0_46, %c0_47, %c0_48], %42 {strides = array<i32>} : memref<1x1x4x1xf32, #tpu.memory_space<vmem>>, vector<1x1x4x1xf32>,
    } else {
    }
    return
  }
  func.func @transform_0(%arg0: i32, %arg1: i32, %arg2: i32) -> (i32, i32, i32, i32) {
    %c0_i32 = arith.constant 0 : i32
    %c0_i32_0 = arith.constant 0 : i32
    return %arg0, %arg1, %c0_i32, %arg2 : i32, i32, i32, i32
  }
  func.func @transform_1(%arg0: i32, %arg1: i32, %arg2: i32) -> (i32, i32, i32) {
    %c0_i32 = arith.constant 0 : i32
    %c0_i32_0 = arith.constant 0 : i32
    %c0_i32_1 = arith.constant 0 : i32
    return %arg1, %c0_i32, %c0_i32_0 : i32, i32, i32
  }
  func.func @transform_2(%arg0: i32, %arg1: i32, %arg2: i32) -> (i32, i32, i32) {
    %c0_i32 = arith.constant 0 : i32
    %c0_i32_0 = arith.constant 0 : i32
    %c0_i32_1 = arith.constant 0 : i32
    return %arg1, %c0_i32, %c0_i32_0 : i32, i32, i32
  }
  func.func @transform_3(%arg0: i32, %arg1: i32, %arg2: i32) -> (i32, i32, i32, i32) {
    %c0_i32 = arith.constant 0 : i32
    %c0_i32_0 = arith.constant 0 : i32
    %c0_i32_1 = arith.constant 0 : i32
    return %arg0, %arg1, %c0_i32, %c0_i32_0 : i32, i32, i32, i32
  }
  func.func @transform_4(%arg0: i32, %arg1: i32, %arg2: i32) -> (i32, i32, i32, i32) {
    %c0_i32 = arith.constant 0 : i32
    %c0_i32_0 = arith.constant 0 : i32
    %c0_i32_1 = arith.constant 0 : i32
    return %arg0, %arg1, %c0_i32, %c0_i32_0 : i32, i32, i32, i32
  }
}

</mosaic_0001>

<llo_original>
// kernel: tpu_custom_call.1
$region0: #{tpu_custom_call.1}
  #allocation0 [shape = 'u32[]', space=smem, size = 0x4, offset = 0x4, fixed_abs, tag = 'smem constant byte address 0x4 - core index']
  #allocation1 [shape = 'u32[144,128]{1,0:T(1,128)}', space=vmem, size = 0x12000, scoped, tag = 'internal scratch']
  #allocation2 [shape = 'f32[1,1,4,1]{3,2,1,0:T(4,128)}', space=vmem, size = 0x800, scoped, tag = 'scratch operand']
  #allocation3 [shape = 'f32[1,1,4,1]{3,2,1,0:T(4,128)}', space=vmem, size = 0x800, scoped, tag = 'scratch operand']
  %s0 = inlined_call_operand.hbm [shape: f32[2,8,4,4096], index: 0, kind: input, shape index: {}]
  %s1 = inlined_call_operand.vmem [shape: f32[8,4,1], index: 1, kind: input, shape index: {}]
  %s2 = inlined_call_operand.vmem [shape: f32[8,4,1], index: 2, kind: input, shape index: {}]
  %s3 = inlined_call_operand.vmem [shape: f32[2,8,4,1], index: 3, kind: output, shape index: {0}]
  %s4 = inlined_call_operand.vmem [shape: f32[2,8,4,1], index: 4, kind: output, shape index: {1}]
  %5 = xla_tuple %s3, %s4
  %s6 = sld [smem:[#allocation0]]
  $region65: #{tpu_custom_call.1} parent=0
    _
  %s8 = ssub.s32 1, %s6
  %s9 = scalar_select 0, %s8, %s6
  $region1: #{tpu_custom_call.1} parent=0
    #allocation4 [shape = 'u8[32768]{0}', space=vmem, size = 0x8000, scoped, tag = 'input window, operand 0']
    #allocation5 [shape = 's32[2]{0}', space=sflag, size = 0x8, scoped, tag = 'scoped memory for tpu_custom_call.1']
    %10 = vsyncpa [#allocation5], 0
    %s11 = scalar_lea.sflag [#allocation5], 1
    %12 = vsyncpa %s11, 0
    loop: start=0, step=1, limit=66
    $region2: #{tpu_custom_call.1} parent=1 // loop_pre_header
      _
    $region3: #{tpu_custom_call.1} parent=1 // loop_header
      %s14 = sphi 0, %s18
      %p15 = scmp.ge.s32.totalorder %s14, 66
      %s21 = sphi 0, %s40
      %s22 = sphi 0, %s36
      %s23 = sphi 0, %s32
      %s24 = sphi 0, %s21
      %s25 = sphi 0, %s22
      %s26 = sphi 0, %s23
      %s27 = sphi 0, %s24
      %s28 = sphi 0, %s25
      %s29 = sphi 0, %s26
      %s47 = sphi 0, %s49
      %s50 = sphi 0, %s47
      %s51 = sphi 0, %s50
      %s67 = sphi 0, %s51
      %s73 = sphi 0, %s75
      %s76 = sphi 0, %s73
      %s77 = sphi 0, %s76
      %s93 = sphi 0, %s77
      %s99 = sphi 0, %s101
      %s102 = sphi 0, %s99
      %s103 = sphi 0, %s102
      %s119 = sphi 0, %s103
      %s127 = sphi 0, %s129
      %s130 = sphi 0, %s127
      %s131 = sphi 0, %s130
      %s147 = sphi 0, %s131
      %s155 = sphi 0, %s157
      %s158 = sphi 0, %s155
      %s159 = sphi 0, %s158
      %s175 = sphi 0, %s159
    $region4: #{tpu_custom_call.1} parent=1 // loop_header_branch
      %17 = sbr.rel (%p15) target = $region8
    $region5: #{tpu_custom_call.1} parent=1 // loop_body
      %s19 = ssub.s32 %s14, 1
      %s20 = ssub.s32 %s14, 2
      %s30 = sadd.s32 1, %s23
      %p31 = scmp.ge.s32.totalorder %s30, 4
      %s32 = scalar_select %p31, 0, %s30
      %s33 = sadd.s32 1, %s22
      %s34 = scalar_select %p31, %s33, %s22
      %p35 = scmp.ge.s32.totalorder %s34, 8
      %s36 = scalar_select %p35, 0, %s34
      %s37 = sadd.s32 1, %s21
      %s38 = scalar_select %p35, %s37, %s21
      %p39 = scmp.ge.s32.totalorder %s38, 2
      %s40 = scalar_select %p39, 0, %s38
      %s41 = ssub.s32 %s21, %s40
      %s42 = ssub.s32 %s22, %s36
      %s43 = sor.u32 %s41, %s42
      %s44 = ssub.s32 %s23, %s32
      %s45 = sor.u32 %s43, %s44
      %p46 = scmp.eq.s32.totalorder %s45, 0
      %s48 = sadd.s32 %s47, 1
      %s49 = scalar_select %p46, %s47, %s48
      %p52 = pneg %p46
      %p53 = scmp.eq.s32.totalorder %s14, 63
      %p54 = por %p52, %p53
      %p55 = scmp.ne.s32.totalorder %s47, %s50
      %p56 = scmp.eq.s32.totalorder %s14, 0
      %p57 = por %p55, %p56
      %p58 = scmp.ne.s32.totalorder %s47, %s50
      %p59 = scmp.eq.s32.totalorder %s19, 63
      %p60 = por %p58, %p59
      %p61 = scmp.ne.s32.totalorder %s50, %s51
      %p62 = scmp.eq.s32.totalorder %s19, 0
      %p63 = por %p61, %p62
      %p64 = scmp.ne.s32.totalorder %s50, %s51
      %p65 = scmp.eq.s32.totalorder %s20, 63
      %p66 = por %p64, %p65
      %p68 = scmp.ne.s32.totalorder %s51, %s67
      %p69 = scmp.eq.s32.totalorder %s20, 0
      %p70 = por %p68, %p69
      %s71 = ssub.s32 %s22, %s36
      %p72 = scmp.eq.s32.totalorder %s71, 0
      %s74 = sadd.s32 %s73, 1
      %s75 = scalar_select %p72, %s73, %s74
      %p78 = pneg %p72
      %p79 = scmp.eq.s32.totalorder %s14, 63
      %p80 = por %p78, %p79
      %p81 = scmp.ne.s32.totalorder %s73, %s76
      %p82 = scmp.eq.s32.totalorder %s14, 0
      %p83 = por %p81, %p82
      %p84 = scmp.ne.s32.totalorder %s73, %s76
      %p85 = scmp.eq.s32.totalorder %s19, 63
      %p86 = por %p84, %p85
      %p87 = scmp.ne.s32.totalorder %s76, %s77
      %p88 = scmp.eq.s32.totalorder %s19, 0
      %p89 = por %p87, %p88
      %p90 = scmp.ne.s32.totalorder %s76, %s77
      %p91 = scmp.eq.s32.totalorder %s20, 63
      %p92 = por %p90, %p91
      %p94 = scmp.ne.s32.totalorder %s77, %s93
      %p95 = scmp.eq.s32.totalorder %s20, 0
      %p96 = por %p94, %p95
      %s97 = ssub.s32 %s22, %s36
      %p98 = scmp.eq.s32.totalorder %s97, 0
      %s100 = sadd.s32 %s99, 1
      %s101 = scalar_select %p98, %s99, %s100
      %p104 = pneg %p98
      %p105 = scmp.eq.s32.totalorder %s14, 63
      %p106 = por %p104, %p105
      %p107 = scmp.ne.s32.totalorder %s99, %s102
      %p108 = scmp.eq.s32.totalorder %s14, 0
      %p109 = por %p107, %p108
      %p110 = scmp.ne.s32.totalorder %s99, %s102
      %p111 = scmp.eq.s32.totalorder %s19, 63
      %p112 = por %p110, %p111
      %p113 = scmp.ne.s32.totalorder %s102, %s103
      %p114 = scmp.eq.s32.totalorder %s19, 0
      %p115 = por %p113, %p114
      %p116 = scmp.ne.s32.totalorder %s102, %s103
      %p117 = scmp.eq.s32.totalorder %s20, 63
      %p118 = por %p116, %p117
      %p120 = scmp.ne.s32.totalorder %s103, %s119
      %p121 = scmp.eq.s32.totalorder %s20, 0
      %p122 = por %p120, %p121
      %s123 = ssub.s32 %s21, %s40
      %s124 = ssub.s32 %s22, %s36
      %s125 = sor.u32 %s123, %s124
      %p126 = scmp.eq.s32.totalorder %s125, 0
      %s128 = sadd.s32 %s127, 1
      %s129 = scalar_select %p126, %s127, %s128
      %p132 = pneg %p126
      %p133 = scmp.eq.s32.totalorder %s14, 63
      %p134 = por %p132, %p133
      %p135 = scmp.ne.s32.totalorder %s127, %s130
      %p136 = scmp.eq.s32.totalorder %s14, 0
      %p137 = por %p135, %p136
      %p138 = scmp.ne.s32.totalorder %s127, %s130
      %p139 = scmp.eq.s32.totalorder %s19, 63
      %p140 = por %p138, %p139
      %p141 = scmp.ne.s32.totalorder %s130, %s131
      %p142 = scmp.eq.s32.totalorder %s19, 0
      %p143 = por %p141, %p142
      %p144 = scmp.ne.s32.totalorder %s130, %s131
      %p145 = scmp.eq.s32.totalorder %s20, 63
      %p146 = por %p144, %p145
      %p148 = scmp.ne.s32.totalorder %s131, %s147
      %p149 = scmp.eq.s32.totalorder %s20, 0
      %p150 = por %p148, %p149
      %s151 = ssub.s32 %s21, %s40
      %s152 = ssub.s32 %s22, %s36
      %s153 = sor.u32 %s151, %s152
      %p154 = scmp.eq.s32.totalorder %s153, 0
      %s156 = sadd.s32 %s155, 1
      %s157 = scalar_select %p154, %s155, %s156
      %p160 = pneg %p154
      %p161 = scmp.eq.s32.totalorder %s14, 63
      %p162 = por %p160, %p161
      %p163 = scmp.ne.s32.totalorder %s155, %s158
      %p164 = scmp.eq.s32.totalorder %s14, 0
      %p165 = por %p163, %p164
      %p166 = scmp.ne.s32.totalorder %s155, %s158
      %p167 = scmp.eq.s32.totalorder %s19, 63
      %p168 = por %p166, %p167
      %p169 = scmp.ne.s32.totalorder %s158, %s159
      %p170 = scmp.eq.s32.totalorder %s19, 0
      %p171 = por %p169, %p170
      %p172 = scmp.ne.s32.totalorder %s158, %s159
      %p173 = scmp.eq.s32.totalorder %s20, 63
      %p174 = por %p172, %p173
      %p176 = scmp.ne.s32.totalorder %s159, %s175
      %p177 = scmp.eq.s32.totalorder %s20, 0
      %p178 = por %p176, %p177
      %p179 = scmp.le.s32.totalorder 1, %s14
      %p180 = scmp.lt.s32.totalorder %s14, 65
      %p181 = pnand %p179, %p180
      %p182 = pneg %p181
      // Predicated region
      $region9: #{tpu_custom_call.1} parent=5 // pred_check
        _
      $region10: #{tpu_custom_call.1} parent=5 // pred_check_branch
        %184 = sbr.rel (%p181) target = $region12
      $region11: #{tpu_custom_call.1} parent=5 // pred_region
        %s185 = ssub.s32 %s14, 1
      $region12: #{tpu_custom_call.1} parent=5 // pred_fallthru
        _
      %p186 = scmp.lt.s32.totalorder %s14, 64
      // Predicated region
      $region13: #{tpu_custom_call.1} parent=5 // pred_check
        %p187 = pneg %p186
      $region14: #{tpu_custom_call.1} parent=5 // pred_check_branch
        %189 = sbr.rel (%p187) target = $region16
      $region15: #{tpu_custom_call.1} parent=5 // pred_region
        // Predicated region
        $region17: #{tpu_custom_call.1} parent=15 // pred_check
          %p190 = pneg %p57
        $region18: #{tpu_custom_call.1} parent=15 // pred_check_branch
          %192 = sbr.rel (%p190) target = $region20
        $region19: #{tpu_custom_call.1} parent=15 // pred_region
          %s193 = sand.u32 %s47, 1
          %s194 = scalar_lea.sflag [#allocation5], %s193
          %s195 = sand.u32 %s47, 1
          %s196 = smul.addr %s195, 32
          %s197 = scalar_lea.vmem [#allocation4], %s196
          %s198 = smul.u32 8, %s23
          %s200 = ssub.s32 512, 512
          %201 = vsyncadd %s194, %s200
          %s202 = smul.addr %s22, 32
          %s203 = sadd.s32 %s198, %s202
          %s204 = smul.addr %s21, 256
          %s205 = sadd.s32 %s203, %s204
          %s206 = smul.addr %s205, 64
          %s207 = scalar_lea.hbm %s0, %s206
          %s209 = sshll.u32 %s197, 4
          %s210 = int_to_ptr.vmem [resolvable:$true] %s209
          %212 = dma.hbm_to_vmem [thread:$0]  %s207, 512, %s210, %s194
        $region20: #{tpu_custom_call.1} parent=15 // pred_fallthru
          _
        // Predicated region
        $region21: #{tpu_custom_call.1} parent=15 // pred_check
          %p213 = pneg %p83
        $region22: #{tpu_custom_call.1} parent=15 // pred_check_branch
          %215 = sbr.rel (%p213) target = $region24
        $region23: #{tpu_custom_call.1} parent=15 // pred_region
          %p216 = scmp.lt.s32.totalorder %s22, 7
          %s217 = scalar_select %p216, %s22, 7
          %s218 = smul.addr %s217, 4
          %s219 = scalar_lea.vmem %s1, %s218
        $region24: #{tpu_custom_call.1} parent=15 // pred_fallthru
          _
        // Predicated region
        $region25: #{tpu_custom_call.1} parent=15 // pred_check
          %p220 = pneg %p109
        $region26: #{tpu_custom_call.1} parent=15 // pred_check_branch
          %222 = sbr.rel (%p220) target = $region28
        $region27: #{tpu_custom_call.1} parent=15 // pred_region
          %p223 = scmp.lt.s32.totalorder %s22, 7
          %s224 = scalar_select %p223, %s22, 7
          %s225 = smul.addr %s224, 4
          %s226 = scalar_lea.vmem %s2, %s225
        $region28: #{tpu_custom_call.1} parent=15 // pred_fallthru
          _
      $region16: #{tpu_custom_call.1} parent=5 // pred_fallthru
        _
      %p227 = scmp.le.s32.totalorder 1, %s14
      %p228 = scmp.lt.s32.totalorder %s14, 65
      %p229 = pnand %p227, %p228
      %p230 = pneg %p229
      // Predicated region
      $region29: #{tpu_custom_call.1} parent=5 // pred_check
        _
      $region30: #{tpu_custom_call.1} parent=5 // pred_check_branch
        %232 = sbr.rel (%p229) target = $region32
      $region31: #{tpu_custom_call.1} parent=5 // pred_region
        %s233 = ssub.s32 %s14, 1
        %s234 = sand.u32 %s50, 1
        %s235 = scalar_lea.sflag [#allocation5], %s234
        %s236 = sand.u32 %s50, 1
        %s237 = smul.addr %s236, 32
        %s238 = scalar_lea.vmem [#allocation4], %s237
        // Predicated region
        $region33: #{tpu_custom_call.1} parent=31 // pred_check
          %p239 = pneg %p63
        $region34: #{tpu_custom_call.1} parent=31 // pred_check_branch
          %241 = sbr.rel (%p239) target = $region36
        $region35: #{tpu_custom_call.1} parent=31 // pred_region
          %242 = dma.done %s235, 512
        $region36: #{tpu_custom_call.1} parent=31 // pred_fallthru
          _
        %s243 = sand.u32 %s50, 1
        %s244 = scalar_lea.sflag [#allocation5], %s243
        %s245 = sand.u32 %s50, 1
        %s246 = smul.addr %s245, 32
        %s247 = scalar_lea.vmem [#allocation4], %s246
        %p248 = pneg %p63
        %p249 = pneg %p60
        %p250 = scmp.lt.s32.totalorder %s25, 7
        %s251 = scalar_select %p250, %s25, 7
        %s252 = smul.addr %s251, 4
        %s253 = scalar_lea.vmem %s1, %s252
        %p254 = pneg %p89
        %p255 = pneg %p86
        %p256 = scmp.lt.s32.totalorder %s25, 7
        %s257 = scalar_select %p256, %s25, 7
        %s258 = smul.addr %s257, 4
        %s259 = scalar_lea.vmem %s2, %s258
        %p260 = pneg %p115
        %p261 = pneg %p112
        %p262 = pneg %p143
        %p263 = pneg %p140
        %p264 = scmp.lt.s32.totalorder %s24, 1
        %s265 = scalar_select %p264, %s24, 1
        %p266 = scmp.lt.s32.totalorder %s25, 7
        %s267 = scalar_select %p266, %s25, 7
        %s268 = smul.addr %s265, 8
        %s269 = sadd.s32 %s267, %s268
        %s270 = smul.addr %s269, 4
        %s271 = scalar_lea.vmem %s3, %s270
        %p272 = pneg %p171
        %p273 = pneg %p168
        %p274 = scmp.lt.s32.totalorder %s24, 1
        %s275 = scalar_select %p274, %s24, 1
        %p276 = scmp.lt.s32.totalorder %s25, 7
        %s277 = scalar_select %p276, %s25, 7
        %s278 = smul.addr %s275, 8
        %s279 = sadd.s32 %s277, %s278
        %s280 = smul.addr %s279, 4
        %s281 = scalar_lea.vmem %s4, %s280
        %s282 = smul.u32 8, %s26
        %p283 = scmp.lt.s32.totalorder %s25, 7
        %s284 = scalar_select %p283, %s25, 7
        %s285 = smul.addr %s284, 4
        %s286 = scalar_lea.vmem %s1, %s285
        %p287 = scmp.lt.s32.totalorder %s25, 7
        %s288 = scalar_select %p287, %s25, 7
        %s289 = smul.addr %s288, 4
        %s290 = scalar_lea.vmem %s2, %s289
        %p291 = scmp.lt.s32.totalorder %s24, 1
        %s292 = scalar_select %p291, %s24, 1
        %p293 = scmp.lt.s32.totalorder %s25, 7
        %s294 = scalar_select %p293, %s25, 7
        %s295 = smul.addr %s292, 8
        %s296 = sadd.s32 %s294, %s295
        %s297 = smul.addr %s296, 4
        %s298 = scalar_lea.vmem %s3, %s297
        %p299 = scmp.lt.s32.totalorder %s24, 1
        %s300 = scalar_select %p299, %s24, 1
        %p301 = scmp.lt.s32.totalorder %s25, 7
        %s302 = scalar_select %p301, %s25, 7
        %s303 = smul.addr %s300, 8
        %s304 = sadd.s32 %s302, %s303
        %s305 = smul.addr %s304, 4
        %s306 = scalar_lea.vmem %s4, %s305
        %p307 = scmp.eq.s32.totalorder %s26, 0
        // Predicated region
        $region37: #{tpu_custom_call.1} parent=31 // pred_check
          %p308 = pneg %p307
        $region38: #{tpu_custom_call.1} parent=31 // pred_check_branch
          %310 = sbr.rel (%p308) target = $region40
        $region39: #{tpu_custom_call.1} parent=31 // pred_region
          %vm311 = vcmask 3072
          %312 = vst.msk [vmem:[#allocation2] sm:$0xf] %vm311, 0.0
          %313 = vst.msk [vmem:[#allocation3] sm:$0xf] %vm311, 0.0
        $region40: #{tpu_custom_call.1} parent=31 // pred_fallthru
          _
        %v314 = vld [vmem:[%s238] sm:$0xff]
        %v315 = vld [vmem:[%s238 + $0x8] sm:$0xff]
        %v316 = vld [vmem:[%s238 + $0x10] sm:$0xff]
        %v317 = vld [vmem:[%s238 + $0x18] sm:$0xff]
        %v318 = vld [vmem:[#allocation2] sm:$0xf]
        %v323 = vcombine.high %v314, %v314
        %v324 = vcombine.high %v315, %v315
        %v325 = vcombine.high %v316, %v316
        %v326 = vcombine.high %v317, %v317
        %vm331 = vcmask 1043456
        %v332 = vsel %vm331, %v314, 0.0
        %v333 = vsel %vm331, %v323, 0.0
        %v334 = vadd.f32 %v332, %v333
        %v335 = vsel %vm331, %v315, 0.0
        %v336 = vadd.f32 %v334, %v335
        %v337 = vsel %vm331, %v324, 0.0
        %v338 = vadd.f32 %v336, %v337
        %v339 = vsel %vm331, %v316, 0.0
        %v340 = vadd.f32 %v338, %v339
        %v341 = vsel %vm331, %v325, 0.0
        %v342 = vadd.f32 %v340, %v341
        %v343 = vsel %vm331, %v317, 0.0
        %v344 = vadd.f32 %v342, %v343
        %v345 = vsel %vm331, %v326, 0.0
        %v346 = vadd.f32 %v344, %v345
        %347 = vadd.xlane.f32.xlu0 %v346
        %v348 = vpop.xlane.xlu0 %347
        %v349 = vadd.f32 %v318, %v348
        %vm350 = vcmask 3072
        %351 = vst.msk [vmem:[#allocation2] sm:$0xf] %vm350, %v349
        %v352 = vld [vmem:[#allocation3] sm:$0xf]
        %v353 = vmul.f32 %v314, %v314
        %v354 = vmul.f32 %v315, %v315
        %v355 = vmul.f32 %v316, %v316
        %v356 = vmul.f32 %v317, %v317
        %v361 = vcombine.high %v353, %v353
        %v362 = vcombine.high %v354, %v354
        %v363 = vcombine.high %v355, %v355
        %v364 = vcombine.high %v356, %v356
        %v369 = vsel %vm331, %v353, 0.0
        %v370 = vsel %vm331, %v361, 0.0
        %v371 = vadd.f32 %v369, %v370
        %v372 = vsel %vm331, %v354, 0.0
        %v373 = vadd.f32 %v371, %v372
        %v374 = vsel %vm331, %v362, 0.0
        %v375 = vadd.f32 %v373, %v374
        %v376 = vsel %vm331, %v355, 0.0
        %v377 = vadd.f32 %v375, %v376
        %v378 = vsel %vm331, %v363, 0.0
        %v379 = vadd.f32 %v377, %v378
        %v380 = vsel %vm331, %v356, 0.0
        %v381 = vadd.f32 %v379, %v380
        %v382 = vsel %vm331, %v364, 0.0
        %v383 = vadd.f32 %v381, %v382
        %384 = vadd.xlane.f32.xlu0 %v383
        %v385 = vpop.xlane.xlu0 %384
        %v386 = vadd.f32 %v352, %v385
        %387 = vst.msk [vmem:[#allocation3] sm:$0xf] %vm350, %v386
        %p388 = scmp.eq.s32.totalorder %s26, 3
        // Predicated region
        $region41: #{tpu_custom_call.1} parent=31 // pred_check
          %p389 = pneg %p388
        $region42: #{tpu_custom_call.1} parent=31 // pred_check_branch
          %391 = sbr.rel (%p389) target = $region44
        $region43: #{tpu_custom_call.1} parent=31 // pred_region
          %v392 = vld [vmem:[#allocation2] sm:$0xf]
          %v393 = vsel %vm350, %v392, 0.0
          %v394 = vrot.slane %v393, 4
          %v395 = vadd.f32 %v393, %v394
          %v396 = vrot.slane %v395, 2
          %v397 = vadd.f32 %v395, %v396
          %v398 = vrot.slane %v397, 1
          %v399 = vadd.f32 %v397, %v398
          %v400 = vmul.f32 %v399, 6.1035156e-05
          %v401 = vld [vmem:[#allocation3] sm:$0xf]
          %v402 = vsel %vm350, %v401, 0.0
          %v403 = vrot.slane %v402, 4
          %v404 = vadd.f32 %v402, %v403
          %v405 = vrot.slane %v404, 2
          %v406 = vadd.f32 %v404, %v405
          %v407 = vrot.slane %v406, 1
          %v408 = vadd.f32 %v406, %v407
          %v409 = vmul.f32 %v408, 6.1035156e-05
          %v410 = vmul.f32 %v400, %v400
          %v411 = vsub.f32 %v409, %v410
          %v412 = vadd.f32 %v411, 1e-06
          %v413 = vrsqrt.pop %v412
          %v414 = vld [vmem:[%s286] sm:$0xf]
          %v415 = vld [vmem:[%s290] sm:$0xf]
          %v416 = vmul.f32 %v414, %v413
          %417 = vst.msk [vmem:[%s298] sm:$0xf] %vm350, %v416
          %v418 = vmul.f32 %v400, %v416
          %v419 = vsub.f32 %v415, %v418
          %420 = vst.msk [vmem:[%s306] sm:$0xf] %vm350, %v419
        $region44: #{tpu_custom_call.1} parent=31 // pred_fallthru
          _
        %p421 = scmp.lt.s32.totalorder %s24, 1
        %s422 = scalar_select %p421, %s24, 1
        %p423 = scmp.lt.s32.totalorder %s25, 7
        %s424 = scalar_select %p423, %s25, 7
        %s425 = smul.addr %s422, 8
        %s426 = sadd.s32 %s424, %s425
        %s427 = smul.addr %s426, 4
        %s428 = scalar_lea.vmem %s3, %s427
        %p429 = scmp.lt.s32.totalorder %s24, 1
        %s430 = scalar_select %p429, %s24, 1
        %p431 = scmp.lt.s32.totalorder %s25, 7
        %s432 = scalar_select %p431, %s25, 7
        %s433 = smul.addr %s430, 8
        %s434 = sadd.s32 %s432, %s433
        %s435 = smul.addr %s434, 4
        %s436 = scalar_lea.vmem %s4, %s435
        // Predicated region
        $region45: #{tpu_custom_call.1} parent=31 // pred_check
          %p437 = pneg %p140
        $region46: #{tpu_custom_call.1} parent=31 // pred_check_branch
          %439 = sbr.rel (%p437) target = $region48
        $region47: #{tpu_custom_call.1} parent=31 // pred_region
          _
        $region48: #{tpu_custom_call.1} parent=31 // pred_fallthru
          _
        // Predicated region
        $region49: #{tpu_custom_call.1} parent=31 // pred_check
          %p440 = pneg %p168
        $region50: #{tpu_custom_call.1} parent=31 // pred_check_branch
          %442 = sbr.rel (%p440) target = $region52
        $region51: #{tpu_custom_call.1} parent=31 // pred_region
          _
        $region52: #{tpu_custom_call.1} parent=31 // pred_fallthru
          _
      $region32: #{tpu_custom_call.1} parent=5 // pred_fallthru
        _
      %p443 = scmp.le.s32.totalorder 2, %s14
      // Predicated region
      $region53: #{tpu_custom_call.1} parent=5 // pred_check
        %p444 = pneg %p443
      $region54: #{tpu_custom_call.1} parent=5 // pred_check_branch
        %446 = sbr.rel (%p444) target = $region56
      $region55: #{tpu_custom_call.1} parent=5 // pred_region
        %s447 = ssub.s32 %s14, 2
        // Predicated region
        $region57: #{tpu_custom_call.1} parent=55 // pred_check
          %p448 = pneg %p146
        $region58: #{tpu_custom_call.1} parent=55 // pred_check_branch
          %450 = sbr.rel (%p448) target = $region60
        $region59: #{tpu_custom_call.1} parent=55 // pred_region
          %p451 = scmp.lt.s32.totalorder %s27, 1
          %s452 = scalar_select %p451, %s27, 1
          %p453 = scmp.lt.s32.totalorder %s28, 7
          %s454 = scalar_select %p453, %s28, 7
          %s455 = smul.addr %s452, 8
          %s456 = sadd.s32 %s454, %s455
          %s457 = smul.addr %s456, 4
          %s458 = scalar_lea.vmem %s3, %s457
        $region60: #{tpu_custom_call.1} parent=55 // pred_fallthru
          _
        // Predicated region
        $region61: #{tpu_custom_call.1} parent=55 // pred_check
          %p459 = pneg %p174
        $region62: #{tpu_custom_call.1} parent=55 // pred_check_branch
          %461 = sbr.rel (%p459) target = $region64
        $region63: #{tpu_custom_call.1} parent=55 // pred_region
          %p462 = scmp.lt.s32.totalorder %s27, 1
          %s463 = scalar_select %p462, %s27, 1
          %p464 = scmp.lt.s32.totalorder %s28, 7
          %s465 = scalar_select %p464, %s28, 7
          %s466 = smul.addr %s463, 8
          %s467 = sadd.s32 %s465, %s466
          %s468 = smul.addr %s467, 4
          %s469 = scalar_lea.vmem %s4, %s468
        $region64: #{tpu_custom_call.1} parent=55 // pred_fallthru
          _
      $region56: #{tpu_custom_call.1} parent=5 // pred_fallthru
        _
    $region6: #{tpu_custom_call.1} parent=1 // loop_footer
      %s18 = sadd.s32 1, %s14
    $region7: #{tpu_custom_call.1} parent=1 // loop_footer_branch
      %13 = sbr.rel target = $region3
    $region8: #{tpu_custom_call.1} parent=1 // loop_exit
      _
    %470 = vsyncpa [#allocation5], 1
    %s471 = scalar_lea.sflag [#allocation5], 1
    %472 = vsyncpa %s471, 1

</llo_original>
